<compile_context>
chip_gen: v6e
topology: v6e:2x2x1
jax: 0.10.0
libtpu: 0.0.40
codegen_flags: <defaults>
</compile_context>

<pallas_src>
import functools

import jax
import jax.numpy as jnp
import numpy as np
from jax.experimental import pallas as pl
from jax.experimental.pallas import tpu as pltpu


def _channel_gate_kernel(x_ref, w1t_ref, b1_ref, w2t_ref, b2_ref, out_ref,
                         *, true_hw: int, padded: bool):
    # x_ref / out_ref block: [TB, C, HWp]   (native dtype)
    # w1t: [C, hid], b1: [1, hid], w2t: [hid, C], b2: [1, C]   (f32, resident)
    x = x_ref[...]
    tb, c, hwp = x.shape

    # In-register upcast only; HBM traffic stays in the input dtype.
    xf = x.astype(jnp.float32)

    if padded:
        lane = jax.lax.broadcasted_iota(jnp.int32, (tb, c, hwp), 2)
        valid = lane < true_hw
        sum_src = jnp.where(valid, xf, 0.0)
        max_src = jnp.where(valid, xf, -jnp.inf)
    else:
        sum_src = xf
        max_src = xf

    # Global average / max pooling over the spatial (lane) axis.
    avg = jnp.sum(sum_src, axis=2) * (1.0 / true_hw)      # [TB, C] f32
    mx = jnp.max(max_src, axis=2)                         # [TB, C] f32

    # Shared MLP applied to all 2*TB pooled vectors at once (one operand per
    # grid step instead of a 2-column matmul per batch element).
    pooled = jnp.concatenate([avg, mx], axis=0)           # [2*TB, C]
    h = jnp.dot(pooled, w1t_ref[...],
                preferred_element_type=jnp.float32) + b1_ref[...]   # [2*TB, hid]
    h = jnp.maximum(h, 0.0)
    a = jnp.dot(h, w2t_ref[...],
                preferred_element_type=jnp.float32) + b2_ref[...]   # [2*TB, C]

    # channel_att_sum = MLP(avg) + MLP(max)  (bias counted once per branch,
    # exactly like the reference).
    att = a[:tb] + a[tb:]                                  # [TB, C]
    scale = jax.nn.sigmoid(att)                            # [TB, C]  (EUP)

    # Broadcast multiply over the lane axis; lane-dense store in native dtype.
    out_ref[...] = (xf * scale[:, :, None]).astype(out_ref.dtype)


def channel_gate(x, w1, b1, w2, b2):
    """x: [N, C, H, W]; w1: [C//r, C]; b1: [C//r]; w2: [C, C//r]; b2: [C]."""
    N, C, H, W = x.shape
    HW = H * W
    hid = w1.shape[0]
    itemsize = jnp.dtype(x.dtype).itemsize

    # Lane-dense last dim: pad H*W up to a multiple of 128 (masked in-kernel).
    HWp = ((HW + 127) // 128) * 128
    padded = HWp != HW

    x3 = x.reshape(N, C, HW)
    if padded:
        x3 = jnp.pad(x3, ((0, 0), (0, 0), (0, HWp - HW)))

    # Batch tile: target ~2 MiB input slab per grid step.
    slab_one = C * HWp * itemsize
    TB = max(1, min(N, (2 << 20) // max(1, slab_one)))
    Np = ((N + TB - 1) // TB) * TB
    if Np != N:
        # Zero batch padding is self-contained (per-element op) and sliced off.
        x3 = jnp.pad(x3, ((0, Np - N), (0, 0), (0, 0)))

    # ~4x slab (2 input + 2 output pipeline buffers) + resident weights.
    slab = TB * slab_one
    weights_bytes = 4 * (2 * C * hid + hid + C)
    vmem_limit = int(max(32 << 20, 4 * slab + 2 * weights_bytes + (2 << 20)))

    kernel = functools.partial(_channel_gate_kernel, true_hw=HW, padded=padded)

    out = pl.pallas_call(
        kernel,
        out_shape=jax.ShapeDtypeStruct((Np, C, HWp), x.dtype),
        grid_spec=pltpu.PrefetchScalarGridSpec(
            num_scalar_prefetch=0,
            grid=(Np // TB,),
            in_specs=[
                pl.BlockSpec((TB, C, HWp), lambda n: (n, 0, 0)),  # x batch tile
                pl.BlockSpec((C, hid), lambda n: (0, 0)),         # W1^T (resident)
                pl.BlockSpec((1, hid), lambda n: (0, 0)),         # b1  (resident)
                pl.BlockSpec((hid, C), lambda n: (0, 0)),         # W2^T (resident)
                pl.BlockSpec((1, C), lambda n: (0, 0)),           # b2  (resident)
            ],
            out_specs=pl.BlockSpec((TB, C, HWp), lambda n: (n, 0, 0)),
        ),
        compiler_params=pltpu.CompilerParams(
            dimension_semantics=("parallel",),
            vmem_limit_bytes=vmem_limit),
    )(
        x3,
        jnp.transpose(w1).astype(jnp.float32),   # [C, hid]
        b1.reshape(1, hid).astype(jnp.float32),  # [1, hid]
        jnp.transpose(w2).astype(jnp.float32),   # [hid, C]
        b2.reshape(1, C).astype(jnp.float32),    # [1, C]
    )

    if padded or Np != N:
        out = out[:N, :, :HW]
    return out.reshape(N, C, H, W)


def channel_gate_ref(x, w1, b1, w2, b2):
    """Pure-JAX reference matching the PyTorch forward."""
    xf = x.astype(jnp.float32)
    avg = jnp.mean(xf, axis=(2, 3))                       # [N, C]
    mx = jnp.max(xf, axis=(2, 3))                         # [N, C]

    def mlp(p):
        h = jnp.maximum(p @ w1.T + b1, 0.0)
        return h @ w2.T + b2

    att = mlp(avg) + mlp(mx)                              # [N, C]
    scale = jax.nn.sigmoid(att)[:, :, None, None]
    return (xf * scale).astype(x.dtype)


if __name__ == "__main__":
    key = jax.random.PRNGKey(0)
    kx, k1, k2, k3, k4 = jax.random.split(key, 5)

    # ChannelGate(gate_channels=32, reduction_ratio=16) -> hidden = 2
    N, C, H, W = 2, 32, 16, 16
    reduction_ratio = 16
    hid = C // reduction_ratio

    x = jax.random.normal(kx, (N, C, H, W), dtype=jnp.float32)

    # nn.Linear default-like init (uniform in +/- 1/sqrt(fan_in)).
    b_w1 = 1.0 / (C ** 0.5)
    w1 = jax.random.uniform(k1, (hid, C), minval=-b_w1, maxval=b_w1,
                            dtype=jnp.float32)
    b1 = jax.random.uniform(k2, (hid,), minval=-b_w1, maxval=b_w1,
                            dtype=jnp.float32)
    b_w2 = 1.0 / (hid ** 0.5)
    w2 = jax.random.uniform(k3, (C, hid), minval=-b_w2, maxval=b_w2,
                            dtype=jnp.float32)
    b2 = jax.random.uniform(k4, (C,), minval=-b_w2, maxval=b_w2,
                            dtype=jnp.float32)

    out = channel_gate(x, w1, b1, w2, b2)
    jax.block_until_ready(out)

    ref = channel_gate_ref(x, w1, b1, w2, b2)
    assert out.shape == (N, C, H, W)
    np.testing.assert_allclose(np.asarray(out), np.asarray(ref),
                               rtol=1e-5, atol=1e-5)
    print("KERNEL_OK")
</pallas_src>

<mosaic_0001>
module attributes {stable_mosaic.version = 11 : i64} {
  func.func @_channel_gate_kernel(%arg0: i32, %arg1: memref<2x32x256xf32, #tpu.memory_space<vmem>>, %arg2: memref<32x2xf32, #tpu.memory_space<vmem>>, %arg3: memref<1x2xf32, #tpu.memory_space<vmem>>, %arg4: memref<2x32xf32, #tpu.memory_space<vmem>>, %arg5: memref<1x32xf32, #tpu.memory_space<vmem>>, %arg6: memref<2x32x256xf32, #tpu.memory_space<vmem>>) attributes {dimension_semantics = [#tpu.dimension_semantics<parallel>], iteration_bounds = array<i64: 1>, scalar_prefetch = 0 : i64, scratch_operands = 0 : i64, tpu.core_type = #tpu.core_type<tc>, window_params = [{transform_indices = @transform_0, window_bounds = array<i64: 2, 32, 256>}, {pipeline_mode = #tpu.pipeline_mode<synchronous>, transform_indices = @transform_1, window_bounds = array<i64: 32, 2>}, {pipeline_mode = #tpu.pipeline_mode<synchronous>, transform_indices = @transform_2, window_bounds = array<i64: 1, 2>}, {pipeline_mode = #tpu.pipeline_mode<synchronous>, transform_indices = @transform_3, window_bounds = array<i64: 2, 32>}, {pipeline_mode = #tpu.pipeline_mode<synchronous>, transform_indices = @transform_4, window_bounds = array<i64: 1, 32>}, {transform_indices = @transform_5, window_bounds = array<i64: 2, 32, 256>}]} {
    %c0 = arith.constant 0 : index
    %c0_0 = arith.constant 0 : index
    %c0_1 = arith.constant 0 : index
    %0 = vector.load %arg1[%c0, %c0_0, %c0_1] : memref<2x32x256xf32, #tpu.memory_space<vmem>>, vector<2x32x256xf32>
    %cst = arith.constant dense<0.000000e+00> : vector<2x32xf32>
    %1 = vector.multi_reduction <add>, %0, %cst [2] : vector<2x32x256xf32> to vector<2x32xf32>
    %cst_2 = arith.constant 3.906250e-03 : f32
    %2 = vector.broadcast %cst_2 : f32 to vector<2x32xf32>
    %3 = arith.mulf %1, %2 : vector<2x32xf32>
    %cst_3 = arith.constant dense<0xFF800000> : vector<2x32xf32>
    %4 = vector.multi_reduction <maximumf>, %0, %cst_3 [2] : vector<2x32x256xf32> to vector<2x32xf32>
    %5 = tpu.concatenate %3, %4 in 0 : vector<2x32xf32>, vector<2x32xf32> -> vector<4x32xf32>
    %c0_4 = arith.constant 0 : index
    %c0_5 = arith.constant 0 : index
    %6 = vector.load %arg2[%c0_4, %c0_5] : memref<32x2xf32, #tpu.memory_space<vmem>>, vector<32x2xf32>
    %cst_6 = arith.constant dense<0.000000e+00> : vector<4x2xf32>
    %7 = tpu.matmul %5, %6, %cst_6 {dimension_numbers = #tpu.dot_dimension_numbers<[1], [0], [0], [1], [0, 0, 1, 1], [], []>} : vector<4x32xf32>, vector<32x2xf32>, vector<4x2xf32> -> vector<4x2xf32>
    %c0_7 = arith.constant 0 : index
    %c0_8 = arith.constant 0 : index
    %8 = vector.load %arg3[%c0_7, %c0_8] : memref<1x2xf32, #tpu.memory_space<vmem>>, vector<1x2xf32>
    %9 = vector.broadcast %8 : vector<1x2xf32> to vector<4x2xf32>
    %10 = arith.addf %7, %9 : vector<4x2xf32>
    %cst_9 = arith.constant 0.000000e+00 : f32
    %11 = vector.broadcast %cst_9 : f32 to vector<4x2xf32>
    %12 = arith.maximumf %10, %11 : vector<4x2xf32>
    %c0_10 = arith.constant 0 : index
    %c0_11 = arith.constant 0 : index
    %13 = vector.load %arg4[%c0_10, %c0_11] : memref<2x32xf32, #tpu.memory_space<vmem>>, vector<2x32xf32>
    %cst_12 = arith.constant dense<0.000000e+00> : vector<4x32xf32>
    %14 = tpu.matmul %12, %13, %cst_12 {dimension_numbers = #tpu.dot_dimension_numbers<[1], [0], [0], [1], [0, 0, 1, 1], [], []>} : vector<4x2xf32>, vector<2x32xf32>, vector<4x32xf32> -> vector<4x32xf32>
    %c0_13 = arith.constant 0 : index
    %c0_14 = arith.constant 0 : index
    %15 = vector.load %arg5[%c0_13, %c0_14] : memref<1x32xf32, #tpu.memory_space<vmem>>, vector<1x32xf32>
    %16 = vector.broadcast %15 : vector<1x32xf32> to vector<4x32xf32>
    %17 = arith.addf %14, %16 : vector<4x32xf32>
    %18 = vector.extract_strided_slice %17 {offsets = [0, 0], sizes = [2, 32], strides = [1, 1]} : vector<4x32xf32> to vector<2x32xf32>
    %19 = vector.extract_strided_slice %17 {offsets = [2, 0], sizes = [2, 32], strides = [1, 1]} : vector<4x32xf32> to vector<2x32xf32>
    %20 = arith.addf %18, %19 : vector<2x32xf32>
    %21 = arith.negf %20 : vector<2x32xf32>
    %22 = math.exp %21 : vector<2x32xf32>
    %cst_15 = arith.constant 1.000000e+00 : f32
    %23 = vector.broadcast %cst_15 : f32 to vector<2x32xf32>
    %24 = arith.addf %23, %22 : vector<2x32xf32>
    %25 = arith.divf %23, %24 : vector<2x32xf32>
    %26 = vector.shape_cast %25 : vector<2x32xf32> to vector<2x32x1xf32>
    %27 = vector.broadcast %26 : vector<2x32x1xf32> to vector<2x32x256xf32>
    %28 = arith.mulf %0, %27 : vector<2x32x256xf32>
    %c0_16 = arith.constant 0 : index
    %c0_17 = arith.constant 0 : index
    %c0_18 = arith.constant 0 : index
    %29 = vector.load %arg6[%c0_16, %c0_17, %c0_18] : memref<2x32x256xf32, #tpu.memory_space<vmem>>, vector<2x32x256xf32>
    tpu.vector_store %arg6[%c0_16, %c0_17, %c0_18], %28 {strides = array<i32>} : memref<2x32x256xf32, #tpu.memory_space<vmem>>, vector<2x32x256xf32>,
    return
  }
  func.func @transform_0(%arg0: i32) -> (i32, i32, i32) {
    %c0_i32 = arith.constant 0 : i32
    %c0_i32_0 = arith.constant 0 : i32
    %c0_i32_1 = arith.constant 0 : i32
    return %arg0, %c0_i32, %c0_i32_0 : i32, i32, i32
  }
  func.func @transform_1(%arg0: i32) -> (i32, i32) {
    %c0_i32 = arith.constant 0 : i32
    %c0_i32_0 = arith.constant 0 : i32
    %c0_i32_1 = arith.constant 0 : i32
    return %c0_i32, %c0_i32_0 : i32, i32
  }
  func.func @transform_2(%arg0: i32) -> (i32, i32) {
    %c0_i32 = arith.constant 0 : i32
    %c0_i32_0 = arith.constant 0 : i32
    %c0_i32_1 = arith.constant 0 : i32
    return %c0_i32, %c0_i32_0 : i32, i32
  }
  func.func @transform_3(%arg0: i32) -> (i32, i32) {
    %c0_i32 = arith.constant 0 : i32
    %c0_i32_0 = arith.constant 0 : i32
    %c0_i32_1 = arith.constant 0 : i32
    return %c0_i32, %c0_i32_0 : i32, i32
  }
  func.func @transform_4(%arg0: i32) -> (i32, i32) {
    %c0_i32 = arith.constant 0 : i32
    %c0_i32_0 = arith.constant 0 : i32
    %c0_i32_1 = arith.constant 0 : i32
    return %c0_i32, %c0_i32_0 : i32, i32
  }
  func.func @transform_5(%arg0: i32) -> (i32, i32, i32) {
    %c0_i32 = arith.constant 0 : i32
    %c0_i32_0 = arith.constant 0 : i32
    %c0_i32_1 = arith.constant 0 : i32
    return %arg0, %c0_i32, %c0_i32_0 : i32, i32, i32
  }
}

</mosaic_0001>

<llo_original>
// kernel: tpu_custom_call.1
$region0: #{tpu_custom_call.1}
  #allocation0 [shape = 'u32[]', space=smem, size = 0x4, offset = 0x4, fixed_abs, tag = 'smem constant byte address 0x4 - core index']
  #allocation1 [shape = 'u32[144,128]{1,0:T(1,128)}', space=vmem, size = 0x12000, scoped, tag = 'internal scratch']
  %s0 = inlined_call_operand.hbm [shape: f32[2,32,256], index: 0, kind: input, shape index: {}]
  %s1 = inlined_call_operand.vmem [shape: f32[32,2], index: 1, kind: input, shape index: {}]
  %s2 = inlined_call_operand.vmem [shape: f32[1,2], index: 2, kind: input, shape index: {}]
  %s3 = inlined_call_operand.vmem [shape: f32[2,32], index: 3, kind: input, shape index: {}]
  %s4 = inlined_call_operand.vmem [shape: f32[1,32], index: 4, kind: input, shape index: {}]
  %s5 = inlined_call_operand.hbm [shape: f32[2,32,256], index: 5, kind: output, shape index: {}]
  %s6 = sld [smem:[#allocation0]]
  $region34: #{tpu_custom_call.1} parent=0
    _
  %s8 = ssub.s32 1, %s6
  %s9 = scalar_select 0, %s8, %s6
  $region1: #{tpu_custom_call.1} parent=0
    #allocation2 [shape = 'u8[65536]{0}', space=vmem, size = 0x10000, scoped, tag = 'input window, operand 0, single buffered']
    #allocation3 [shape = 's32[1]{0}', space=sflag, size = 0x4, scoped, tag = 'scoped memory for tpu_custom_call.1']
    #allocation4 [shape = 's32[1]{0}', space=sflag, size = 0x4, scoped, tag = 'scoped memory for tpu_custom_call.1']
    #allocation5 [shape = 'u8[65536]{0}', space=vmem, size = 0x10000, scoped, tag = 'output window, operand 0, single buffered']
    %10 = vsyncpa [#allocation3], 0
    %11 = vsyncpa [#allocation4], 0
    // Predicated region
    $region2: #{tpu_custom_call.1} parent=1 // pred_check
      _
    $region3: #{tpu_custom_call.1} parent=1 // pred_check_branch
      %13 = sbr.rel (0) target = $region5
    $region4: #{tpu_custom_call.1} parent=1 // pred_region
      %s15 = ssub.s32 2048, 2048
      %16 = vsyncadd [#allocation3], %s15
      %s17 = sshll.u32 [#allocation2], 4
      %s18 = int_to_ptr.vmem [resolvable:$true] %s17
      %23 = dma.hbm_to_vmem [thread:$0]  %s0, 2048, %s18, [#allocation3], 256, 256, 16
    $region5: #{tpu_custom_call.1} parent=1 // pred_fallthru
      _
    // Predicated region
    $region6: #{tpu_custom_call.1} parent=1 // pred_check
      _
    $region7: #{tpu_custom_call.1} parent=1 // pred_check_branch
      %25 = sbr.rel (0) target = $region9
    $region8: #{tpu_custom_call.1} parent=1 // pred_region
      _
    $region9: #{tpu_custom_call.1} parent=1 // pred_fallthru
      _
    // Predicated region
    $region10: #{tpu_custom_call.1} parent=1 // pred_check
      _
    $region11: #{tpu_custom_call.1} parent=1 // pred_check_branch
      %27 = sbr.rel (0) target = $region13
    $region12: #{tpu_custom_call.1} parent=1 // pred_region
      _
    $region13: #{tpu_custom_call.1} parent=1 // pred_fallthru
      _
    // Predicated region
    $region14: #{tpu_custom_call.1} parent=1 // pred_check
      _
    $region15: #{tpu_custom_call.1} parent=1 // pred_check_branch
      %29 = sbr.rel (0) target = $region17
    $region16: #{tpu_custom_call.1} parent=1 // pred_region
      _
    $region17: #{tpu_custom_call.1} parent=1 // pred_fallthru
      _
    // Predicated region
    $region18: #{tpu_custom_call.1} parent=1 // pred_check
      _
    $region19: #{tpu_custom_call.1} parent=1 // pred_check_branch
      %31 = sbr.rel (0) target = $region21
    $region20: #{tpu_custom_call.1} parent=1 // pred_region
      _
    $region21: #{tpu_custom_call.1} parent=1 // pred_fallthru
      _
    // Predicated region
    $region22: #{tpu_custom_call.1} parent=1 // pred_check
      _
    $region23: #{tpu_custom_call.1} parent=1 // pred_check_branch
      %33 = sbr.rel (0) target = $region25
    $region24: #{tpu_custom_call.1} parent=1 // pred_region
      %34 = dma.done [#allocation3], 2048
    $region25: #{tpu_custom_call.1} parent=1 // pred_fallthru
      _
    %v35 = vld [vmem:[#allocation2] sm:$0xff]
    %v36 = vld [vmem:[#allocation2 + $0x8] sm:$0xff]
    %v37 = vld [vmem:[#allocation2 + $0x10] sm:$0xff]
    %v38 = vld [vmem:[#allocation2 + $0x18] sm:$0xff]
    %v39 = vld [vmem:[#allocation2 + $0x20] sm:$0xff]
    %v40 = vld [vmem:[#allocation2 + $0x28] sm:$0xff]
    %v41 = vld [vmem:[#allocation2 + $0x30] sm:$0xff]
    %v42 = vld [vmem:[#allocation2 + $0x38] sm:$0xff]
    %v43 = vld [vmem:[#allocation2 + $0x40] sm:$0xff]
    %v44 = vld [vmem:[#allocation2 + $0x48] sm:$0xff]
    %v45 = vld [vmem:[#allocation2 + $0x50] sm:$0xff]
    %v46 = vld [vmem:[#allocation2 + $0x58] sm:$0xff]
    %v47 = vld [vmem:[#allocation2 + $0x60] sm:$0xff]
    %v48 = vld [vmem:[#allocation2 + $0x68] sm:$0xff]
    %v49 = vld [vmem:[#allocation2 + $0x70] sm:$0xff]
    %v50 = vld [vmem:[#allocation2 + $0x78] sm:$0xff]
    %v51 = vadd.f32 %v35, %v36
    %52 = vadd.xlane.f32.xlu0 %v51
    %v53 = vpop.xlane.xlu0 %52
    %v54 = vadd.f32 %v37, %v38
    %55 = vadd.xlane.f32.xlu0 %v54
    %v56 = vpop.xlane.xlu0 %55
    %v57 = vadd.f32 %v39, %v40
    %58 = vadd.xlane.f32.xlu0 %v57
    %v59 = vpop.xlane.xlu0 %58
    %v60 = vadd.f32 %v41, %v42
    %61 = vadd.xlane.f32.xlu0 %v60
    %v62 = vpop.xlane.xlu0 %61
    %v63 = vadd.f32 %v43, %v44
    %64 = vadd.xlane.f32.xlu0 %v63
    %v65 = vpop.xlane.xlu0 %64
    %v66 = vadd.f32 %v45, %v46
    %67 = vadd.xlane.f32.xlu0 %v66
    %v68 = vpop.xlane.xlu0 %67
    %v69 = vadd.f32 %v47, %v48
    %70 = vadd.xlane.f32.xlu0 %v69
    %v71 = vpop.xlane.xlu0 %70
    %v72 = vadd.f32 %v49, %v50
    %73 = vadd.xlane.f32.xlu0 %v72
    %v74 = vpop.xlane.xlu0 %73
    %v75 = vmul.f32 %v53, 0.00390625
    %v76 = vmul.f32 %v56, 0.00390625
    %v77 = vmul.f32 %v59, 0.00390625
    %v78 = vmul.f32 %v62, 0.00390625
    %v79 = vmul.f32 %v65, 0.00390625
    %v80 = vmul.f32 %v68, 0.00390625
    %v81 = vmul.f32 %v71, 0.00390625
    %v82 = vmul.f32 %v74, 0.00390625
    %v83 = vmax.f32 %v35, %v36
    %84 = vmax.xlane.f32.xlu0 %v83
    %v85 = vpop.xlane.xlu0 %84
    %v86 = vmax.f32 %v37, %v38
    %87 = vmax.xlane.f32.xlu0 %v86
    %v88 = vpop.xlane.xlu0 %87
    %v89 = vmax.f32 %v39, %v40
    %90 = vmax.xlane.f32.xlu0 %v89
    %v91 = vpop.xlane.xlu0 %90
    %v92 = vmax.f32 %v41, %v42
    %93 = vmax.xlane.f32.xlu0 %v92
    %v94 = vpop.xlane.xlu0 %93
    %v95 = vmax.f32 %v43, %v44
    %96 = vmax.xlane.f32.xlu0 %v95
    %v97 = vpop.xlane.xlu0 %96
    %v98 = vmax.f32 %v45, %v46
    %99 = vmax.xlane.f32.xlu0 %v98
    %v100 = vpop.xlane.xlu0 %99
    %v101 = vmax.f32 %v47, %v48
    %102 = vmax.xlane.f32.xlu0 %v101
    %v103 = vpop.xlane.xlu0 %102
    %v104 = vmax.f32 %v49, %v50
    %105 = vmax.xlane.f32.xlu0 %v104
    %v106 = vpop.xlane.xlu0 %105
    %v115 = vlaneseq
    %v116 = vand.u32 %v115, 127
    %v117 = vlaneseq
    %v118 = vshrl.u32 %v117, 7
    %v119 = vsub.s32 %v116, %v118
    %v120 = vrot.slane %v75, %v119
    %v121 = vadd.s32 %v116, 4294967288
    %v122 = vlaneseq
    %v123 = vshrl.u32 %v122, 7
    %v124 = vsub.s32 %v121, %v123
    %v125 = vrot.slane %v76, %v124
    %vm126 = vcmask 130112
    %v127 = vsel %vm126, %v125, %v120
    %v128 = vadd.s32 %v116, 4294967280
    %v129 = vlaneseq
    %v130 = vshrl.u32 %v129, 7
    %v131 = vsub.s32 %v128, %v130
    %v132 = vrot.slane %v77, %v131
    %vm133 = vcmask 195712
    %v134 = vsel %vm133, %v132, %v127
    %v135 = vadd.s32 %v116, 4294967272
    %v136 = vlaneseq
    %v137 = vshrl.u32 %v136, 7
    %v138 = vsub.s32 %v135, %v137
    %v139 = vrot.slane %v78, %v138
    %vm140 = vcmask 261312
    %v141 = vsel %vm140, %v139, %v134
    %v142 = vlaneseq
    %v143 = vshrl.u32 %v142, 7
    %v144 = vsub.s32 %v116, %v143
    %v145 = vrot.slane %v79, %v144
    %v146 = vlaneseq
    %v147 = vshrl.u32 %v146, 7
    %v148 = vsub.s32 %v121, %v147
    %v149 = vrot.slane %v80, %v148
    %v150 = vsel %vm126, %v149, %v145
    %v151 = vlaneseq
    %v152 = vshrl.u32 %v151, 7
    %v153 = vsub.s32 %v128, %v152
    %v154 = vrot.slane %v81, %v153
    %v155 = vsel %vm133, %v154, %v150
    %v156 = vlaneseq
    %v157 = vshrl.u32 %v156, 7
    %v158 = vsub.s32 %v135, %v157
    %v159 = vrot.slane %v82, %v158
    %v160 = vsel %vm140, %v159, %v155
    %vm161 = vcmask 1041409
    %v162 = vsel %vm161, %v160, %v141
    %v172 = vlaneseq
    %v173 = vshrl.u32 %v172, 7
    %v174 = vsub.s32 %v116, %v173
    %v175 = vrot.slane %v85, %v174
    %v176 = vlaneseq
    %v177 = vshrl.u32 %v176, 7
    %v178 = vsub.s32 %v121, %v177
    %v179 = vrot.slane %v88, %v178
    %v180 = vsel %vm126, %v179, %v175
    %v181 = vlaneseq
    %v182 = vshrl.u32 %v181, 7
    %v183 = vsub.s32 %v128, %v182
    %v184 = vrot.slane %v91, %v183
    %v185 = vsel %vm133, %v184, %v180
    %v186 = vlaneseq
    %v187 = vshrl.u32 %v186, 7
    %v188 = vsub.s32 %v135, %v187
    %v189 = vrot.slane %v94, %v188
    %v190 = vsel %vm140, %v189, %v185
    %v191 = vlaneseq
    %v192 = vshrl.u32 %v191, 7
    %v193 = vsub.s32 %v116, %v192
    %v194 = vrot.slane %v97, %v193
    %v195 = vlaneseq
    %v196 = vshrl.u32 %v195, 7
    %v197 = vsub.s32 %v121, %v196
    %v198 = vrot.slane %v100, %v197
    %v199 = vsel %vm126, %v198, %v194
    %v200 = vlaneseq
    %v201 = vshrl.u32 %v200, 7
    %v202 = vsub.s32 %v128, %v201
    %v203 = vrot.slane %v103, %v202
    %v204 = vsel %vm133, %v203, %v199
    %v205 = vlaneseq
    %v206 = vshrl.u32 %v205, 7
    %v207 = vsub.s32 %v135, %v206
    %v208 = vrot.slane %v106, %v207
    %v209 = vsel %vm140, %v208, %v204
    %vm210 = vcmask 1043459
    %v211 = vsel %vm210, %v209, %v190
    %vm213 = vcmask 1041408
    %v214 = vsel %vm213, %v162, %v211
    %v215 = vld [vmem:[%s1] sm:$0xff]
    %v216 = vld [vmem:[%s1 + $0x8] sm:$0xff]
    %v217 = vld [vmem:[%s1 + $0x10] sm:$0xff]
    %v218 = vld [vmem:[%s1 + $0x18] sm:$0xff]
    %v219 = vld [vmem:[%s2] sm:$0x1]
    %v221 = vlaneseq
    %v222 = vshrl.u32 %v221, 7
    %v223 = vsub.s32 0, %v222
    %v224 = vrot.slane %v219, %v223
    %vm226 = vcmask 261120
    %v228 = vsel %vm226, %v214, 0
    %230 = vmatprep.subr.mxu0 0.0
    %231 = vmatpush1.msra.mxu0 0.0
    %232 = vmatprep.subr.mxu0 0.0
    %233 = vmatpush1.msra.mxu0 0.0
    %234 = vmatprep.subr.mxu0 0.0
    %235 = vmatpush1.msra.mxu0 0.0
    %236 = vmatprep.subr.mxu0 0.0
    %237 = vmatpush1.msra.mxu0 0.0
    %238 = vmatprep.subr.mxu0 0.0
    %239 = vmatpush1.msra.mxu0 0.0
    %240 = vmatprep.subr.mxu0 0.0
    %241 = vmatpush1.msra.mxu0 0.0
    %242 = vmatprep.subr.mxu0 0.0
    %243 = vmatpush1.msra.mxu0 0.0
    %244 = vmatprep.subr.mxu0 0.0
    %245 = vmatpush1.msra.mxu0 0.0
    %246 = vmatprep.subr.mxu0 0.0
    %247 = vmatpush1.msra.mxu0 0.0
    %248 = vmatprep.subr.mxu0 0.0
    %249 = vmatpush1.msra.mxu0 0.0
    %250 = vmatprep.subr.mxu0 0.0
    %251 = vmatpush1.msra.mxu0 0.0
    %252 = vmatprep.subr.mxu0 0.0
    %253 = vmatpush1.msra.mxu0 0.0
    %254 = vmatprep.subr.mxu0 0.0
    %255 = vmatpush1.msra.mxu0 %v218
    %256 = vmatprep.subr.mxu0 0.0
    %257 = vmatpush1.msra.mxu0 %v217
    %258 = vmatprep.subr.mxu0 0.0
    %259 = vmatpush1.msra.mxu0 %v216
    %260 = vmatprep.subr.mxu0 0.0
    %261 = vmatpush1.msra.mxu0 %v215
    %262 = vmatprep.subr.mxu0 0.0
    %263 = vmatpush2.msra.mxu0 0.0
    %264 = vmatprep.subr.mxu0 0.0
    %265 = vmatpush2.msra.mxu0 0.0
    %266 = vmatprep.subr.mxu0 0.0
    %267 = vmatpush2.msra.mxu0 0.0
    %268 = vmatprep.subr.mxu0 0.0
    %269 = vmatpush2.msra.mxu0 0.0
    %270 = vmatprep.subr.mxu0 0.0
    %271 = vmatpush2.msra.mxu0 0.0
    %272 = vmatprep.subr.mxu0 0.0
    %273 = vmatpush2.msra.mxu0 0.0
    %274 = vmatprep.subr.mxu0 0.0
    %275 = vmatpush2.msra.mxu0 0.0
    %276 = vmatprep.subr.mxu0 0.0
    %277 = vmatpush2.msra.mxu0 0.0
    %278 = vmatprep.subr.mxu0 0.0
    %279 = vmatpush2.msra.mxu0 0.0
    %280 = vmatprep.subr.mxu0 0.0
    %281 = vmatpush2.msra.mxu0 0.0
    %282 = vmatprep.subr.mxu0 0.0
    %283 = vmatpush2.msra.mxu0 0.0
    %284 = vmatprep.subr.mxu0 0.0
    %285 = vmatpush2.msra.mxu0 0.0
    %286 = vmatprep.subr.mxu0 0.0
    %287 = vmatpush2.msra.mxu0 0.0
    %288 = vmatprep.subr.mxu0 0.0
    %289 = vmatpush2.msra.mxu0 0.0
    %290 = vmatprep.subr.mxu0 0.0
    %291 = vmatpush2.msra.mxu0 0.0
    %292 = vmatprep.subr.mxu0 0.0
    %293 = vmatpush2.msra.mxu0 0.0
    %294 = vmatprep.mubr.f32.mxu0 0.0
    %295 = vmatmul.mubr.f32.gmra.mxu0 %v228
    %v296 = vpop.f32.mrf.mxu0
    %v297 = vadd.f32 %v224, %v296
    %v298 = vpop.f32.mrf.mxu0
    %299 = vdwg.mxu0
    %v300 = vmax.f32 %v297, 0.0
    %v301 = vld [vmem:[%s3] sm:$0x3]
    %v302 = vld [vmem:[%s4] sm:$0x1]
    %v304 = vlaneseq
    %v305 = vshrl.u32 %v304, 7
    %v306 = vsub.s32 0, %v305
    %v307 = vrot.slane %v302, %v306
    %vm309 = vcmask 15360
    %v311 = vsel %vm309, %v300, 0
    %v314 = vsel %vm213, %v301, 0
    %316 = vmatprep.subr.mxu0 0.0
    %317 = vmatpush1.msra.mxu0 0.0
    %318 = vmatprep.subr.mxu0 0.0
    %319 = vmatpush1.msra.mxu0 0.0
    %320 = vmatprep.subr.mxu0 0.0
    %321 = vmatpush1.msra.mxu0 0.0
    %322 = vmatprep.subr.mxu0 0.0
    %323 = vmatpush1.msra.mxu0 0.0
    %324 = vmatprep.subr.mxu0 0.0
    %325 = vmatpush1.msra.mxu0 0.0
    %326 = vmatprep.subr.mxu0 0.0
    %327 = vmatpush1.msra.mxu0 0.0
    %328 = vmatprep.subr.mxu0 0.0
    %329 = vmatpush1.msra.mxu0 0.0
    %330 = vmatprep.subr.mxu0 0.0
    %331 = vmatpush1.msra.mxu0 0.0
    %332 = vmatprep.subr.mxu0 0.0
    %333 = vmatpush1.msra.mxu0 0.0
    %334 = vmatprep.subr.mxu0 0.0
    %335 = vmatpush1.msra.mxu0 0.0
    %336 = vmatprep.subr.mxu0 0.0
    %337 = vmatpush1.msra.mxu0 0.0
    %338 = vmatprep.subr.mxu0 0.0
    %339 = vmatpush1.msra.mxu0 0.0
    %340 = vmatprep.subr.mxu0 0.0
    %341 = vmatpush1.msra.mxu0 0.0
    %342 = vmatprep.subr.mxu0 0.0
    %343 = vmatpush1.msra.mxu0 0.0
    %344 = vmatprep.subr.mxu0 0.0
    %345 = vmatpush1.msra.mxu0 0.0
    %346 = vmatprep.subr.mxu0 0.0
    %347 = vmatpush1.msra.mxu0 %v314
    %348 = vmatprep.subr.mxu0 0.0
    %349 = vmatpush2.msra.mxu0 0.0
    %350 = vmatprep.subr.mxu0 0.0
    %351 = vmatpush2.msra.mxu0 0.0
    %352 = vmatprep.subr.mxu0 0.0
    %353 = vmatpush2.msra.mxu0 0.0
    %354 = vmatprep.subr.mxu0 0.0
    %355 = vmatpush2.msra.mxu0 0.0
    %356 = vmatprep.subr.mxu0 0.0
    %357 = vmatpush2.msra.mxu0 0.0
    %358 = vmatprep.subr.mxu0 0.0
    %359 = vmatpush2.msra.mxu0 0.0
    %360 = vmatprep.subr.mxu0 0.0
    %361 = vmatpush2.msra.mxu0 0.0
    %362 = vmatprep.subr.mxu0 0.0
    %363 = vmatpush2.msra.mxu0 0.0
    %364 = vmatprep.subr.mxu0 0.0
    %365 = vmatpush2.msra.mxu0 0.0
    %366 = vmatprep.subr.mxu0 0.0
    %367 = vmatpush2.msra.mxu0 0.0
    %368 = vmatprep.subr.mxu0 0.0
    %369 = vmatpush2.msra.mxu0 0.0
    %370 = vmatprep.subr.mxu0 0.0
    %371 = vmatpush2.msra.mxu0 0.0
    %372 = vmatprep.subr.mxu0 0.0
    %373 = vmatpush2.msra.mxu0 0.0
    %374 = vmatprep.subr.mxu0 0.0
    %375 = vmatpush2.msra.mxu0 0.0
    %376 = vmatprep.subr.mxu0 0.0
    %377 = vmatpush2.msra.mxu0 0.0
    %378 = vmatprep.subr.mxu0 0.0
    %379 = vmatpush2.msra.mxu0 0.0
    %380 = vmatprep.mubr.f32.mxu0 0.0
    %381 = vmatmul.mubr.f32.gmra.mxu0 %v311
    %v382 = vpop.f32.mrf.mxu0
    %v383 = vadd.f32 %v307, %v382
    %v384 = vpop.f32.mrf.mxu0
    %385 = vdwg.mxu0
    %v387 = vrot.slane %v383, 2
    %v389 = vadd.f32 %v383, %v387
    %v390 = vxor.u32 %v389, 2147483648
    %v391 = vmul.f32 %v390, 1.442695
    %v392 = vpow.pop %v391
    %v393 = vadd.f32 %v392, 1.0
    %v394 = vrcp.pop %v393
    %v395 = vmul.f32 1.0, %v394
    %v396 = vlaneseq
    %v397 = vshrl.u32 %v396, 7
    %v398 = vsub.s32 0, %v397
    %v399 = vrot.slane %v395, %v398
    %401 = vbcast.lane.b32.xlu0 %v399, 256
    %v402 = vpop.permute.xlu0 %401
    %s404 = sor.u32 256, 8
    %405 = vbcast.lane.b32.xlu0 %v399, %s404
    %v406 = vpop.permute.xlu0 %405
    %s408 = sor.u32 256, 16
    %409 = vbcast.lane.b32.xlu0 %v399, %s408
    %v410 = vpop.permute.xlu0 %409
    %s412 = sor.u32 256, 24
    %413 = vbcast.lane.b32.xlu0 %v399, %s412
    %v414 = vpop.permute.xlu0 %413
    %v415 = vlaneseq
    %v416 = vshrl.u32 %v415, 7
    %v417 = vsub.s32 1, %v416
    %v418 = vrot.slane %v395, %v417
    %420 = vbcast.lane.b32.xlu0 %v418, 256
    %v421 = vpop.permute.xlu0 %420
    %s423 = sor.u32 256, 8
    %424 = vbcast.lane.b32.xlu0 %v418, %s423
    %v425 = vpop.permute.xlu0 %424
    %s427 = sor.u32 256, 16
    %428 = vbcast.lane.b32.xlu0 %v418, %s427
    %v429 = vpop.permute.xlu0 %428
    %s431 = sor.u32 256, 24
    %432 = vbcast.lane.b32.xlu0 %v418, %s431
    %v433 = vpop.permute.xlu0 %432
    %v434 = vmul.f32 %v35, %v402
    %v435 = vmul.f32 %v36, %v402
    %v436 = vmul.f32 %v37, %v406
    %v437 = vmul.f32 %v38, %v406
    %v438 = vmul.f32 %v39, %v410
    %v439 = vmul.f32 %v40, %v410
    %v440 = vmul.f32 %v41, %v414
    %v441 = vmul.f32 %v42, %v414
    %v442 = vmul.f32 %v43, %v421
    %v443 = vmul.f32 %v44, %v421
    %v444 = vmul.f32 %v45, %v425
    %v445 = vmul.f32 %v46, %v425
    %v446 = vmul.f32 %v47, %v429
    %v447 = vmul.f32 %v48, %v429
    %v448 = vmul.f32 %v49, %v433
    %v449 = vmul.f32 %v50, %v433
    %450 = vst [vmem:[#allocation5] sm:$0xff] %v434
    %451 = vst [vmem:[#allocation5 + $0x8] sm:$0xff] %v435
    %452 = vst [vmem:[#allocation5 + $0x10] sm:$0xff] %v436
    %453 = vst [vmem:[#allocation5 + $0x18] sm:$0xff] %v437
    %454 = vst [vmem:[#allocation5 + $0x20] sm:$0xff] %v438
    %455 = vst [vmem:[#allocation5 + $0x28] sm:$0xff] %v439
    %456 = vst [vmem:[#allocation5 + $0x30] sm:$0xff] %v440
    %457 = vst [vmem:[#allocation5 + $0x38] sm:$0xff] %v441
    %458 = vst [vmem:[#allocation5 + $0x40] sm:$0xff] %v442
    %459 = vst [vmem:[#allocation5 + $0x48] sm:$0xff] %v443
    %460 = vst [vmem:[#allocation5 + $0x50] sm:$0xff] %v444
    %461 = vst [vmem:[#allocation5 + $0x58] sm:$0xff] %v445
    %462 = vst [vmem:[#allocation5 + $0x60] sm:$0xff] %v446
    %463 = vst [vmem:[#allocation5 + $0x68] sm:$0xff] %v447
    %464 = vst [vmem:[#allocation5 + $0x70] sm:$0xff] %v448
    %465 = vst [vmem:[#allocation5 + $0x78] sm:$0xff] %v449
    // Predicated region
    $region26: #{tpu_custom_call.1} parent=1 // pred_check
      _
    $region27: #{tpu_custom_call.1} parent=1 // pred_check_branch
      %467 = sbr.rel (0) target = $region29
    $region28: #{tpu_custom_call.1} parent=1 // pred_region
      %s469 = ssub.s32 2048, 2048
      %470 = vsyncadd [#allocation4], %s469
      %s471 = sshll.u32 [#allocation5], 4
      %s472 = int_to_ptr.vmem [resolvable:$true] %s471
      %477 = dma.vmem_to_hbm [thread:$0]  %s472, 2048, %s5, [#allocation4], 256, 256, 16
    $region29: #{tpu_custom_call.1} parent=1 // pred_fallthru
      _
    // Predicated region
    $region30: #{tpu_custom_call.1} parent=1 // pred_check
      _
    $region31: #{tpu_custom_call.1} parent=1 // pred_check_branch
      %479 = sbr.rel (0) target = $region33
    $region32: #{tpu_custom_call.1} parent=1 // pred_region
      %480 = dma.done [#allocation4], 2048
    $region33: #{tpu_custom_call.1} parent=1 // pred_fallthru
      _
    %481 = vsyncpa [#allocation3], 1
    %482 = vsyncpa [#allocation4], 1

</llo_original>
